<compile_context>
chip_gen: v7x
topology: tpu7x:2x2x1
jax: 0.10.0
libtpu: 0.0.40
codegen_flags: <defaults>
</compile_context>

<pallas_src>
import jax
import jax.numpy as jnp
from jax import lax
from jax.experimental import pallas as pl
from jax.experimental.pallas import tpu as pltpu


def mlp_kernel(x_ref, w1_ref, b1_ref, w2_ref, b2_ref, w3_ref, b3_ref, o_ref):
    # x:  (TB, 20)  f32  (natural layout; cast + relayout happen in-kernel)
    # w1: (200, 20) bf16   b1: (200, 1) f32
    # w2: (100,200) bf16   b2: (100, 1) f32
    # w3: (100, 1)  f32    b3: (1, 1)   f32
    x_bf = x_ref[...].astype(jnp.bfloat16)

    # Layer 1: contract the shared feature dim of w1 (200,20) and x (TB,20)
    # -> (200, TB); the batch lands on the lane axis, so everything downstream
    # (and the final store) is lane-dense.
    h1 = lax.dot_general(
        w1_ref[...], x_bf,
        dimension_numbers=(((1,), (1,)), ((), ())),
        preferred_element_type=jnp.float32) + b1_ref[...]
    h1 = jnp.maximum(h1, 0.0).astype(jnp.bfloat16)

    # Layer 2: (100,200) @ (200,TB) -> (100,TB), f32 accumulate.
    h2 = jnp.dot(w2_ref[...], h1,
                 preferred_element_type=jnp.float32) + b2_ref[...]
    h2 = jnp.maximum(h2, 0.0)                       # keep f32 (VPU-safe on v5e)

    # Layer 3 (single output feature): VPU multiply + cross-sublane reduce
    # instead of a third MXU call -> (1, TB) lane-dense output row.
    o = jnp.sum(w3_ref[...] * h2, axis=0, keepdims=True) + b3_ref[...]
    o_ref[...] = o.astype(o_ref.dtype)


def mlp_forward(x, kparams, *, tb=4096):
    """x: (B, 20) float32 -> (B, 1) float32. kparams from prepare_params()."""
    w1b, b1, w2b, b2, w3col, b3 = kparams
    B, d_in = x.shape

    # Lane-align the batch tile, cap it at 8192 and at the (rounded-up) batch.
    bp128 = pl.cdiv(B, 128) * 128
    tb = max(128, (min(tb, 8192) // 128) * 128)
    tb = min(tb, bp128)
    # Give the grid >=2 steps whenever the batch allows so v7x's two
    # TensorCores both get work (no effect on single-TC v5e/v6e).
    if bp128 >= 256:
        tb = min(tb, max(128, pl.cdiv(pl.cdiv(B, 2), 128) * 128))

    grid = (pl.cdiv(B, tb),)

    # Constant index_map -> block is DMA'd once and stays VMEM-resident.
    resident = lambda a: pl.BlockSpec(a.shape, lambda i: (0,) * a.ndim)

    outT = pl.pallas_call(
        mlp_kernel,
        out_shape=jax.ShapeDtypeStruct((1, B), jnp.float32),
        grid=grid,
        in_specs=[
            pl.BlockSpec((tb, d_in), lambda i: (i, 0)),   # streamed activations
            resident(w1b), resident(b1),
            resident(w2b), resident(b2),
            resident(w3col), resident(b3),
        ],
        out_specs=pl.BlockSpec((1, tb), lambda i: (0, i)),  # lane-dense output
        compiler_params=pltpu.CompilerParams(
            dimension_semantics=("parallel",),               # dual-TC on v7x
            vmem_limit_bytes=48 * 1024 * 1024,               # big tiles on v5e too
        ),
    )(x, w1b, b1, w2b, b2, w3col, b3)

    return outT.reshape(B, 1)


def init_params(key):
    """PyTorch-style nn.Linear params: W (out, in), b (out,), default init."""
    def linear(key, fan_in, fan_out):
        kw, kb = jax.random.split(key)
        bound = 1.0 / jnp.sqrt(fan_in)
        w = jax.random.uniform(kw, (fan_out, fan_in), jnp.float32, -bound, bound)
        b = jax.random.uniform(kb, (fan_out,), jnp.float32, -bound, bound)
        return w, b

    k1, k2, k3 = jax.random.split(key, 3)
    return linear(k1, 20, 200), linear(k2, 200, 100), linear(k3, 100, 1)


def prepare_params(params):
    """One-time conversion to kernel layout/precision (hoisted out of the
    forward so weights are not re-cast / re-uploaded every call)."""
    (w1, b1), (w2, b2), (w3, b3) = params
    return (w1.astype(jnp.bfloat16), b1.reshape(-1, 1),
            w2.astype(jnp.bfloat16), b2.reshape(-1, 1),
            w3.reshape(-1, 1).astype(jnp.float32),   # (1,100) -> (100,1) column
            b3.reshape(1, 1))


if __name__ == "__main__":
    key = jax.random.PRNGKey(0)
    k_params, k_x = jax.random.split(key)

    params = init_params(k_params)
    kparams = prepare_params(params)      # cast/layout done once, not per call

    # Small demo batch, deliberately NOT a multiple of 128: exercises the
    # Pallas ragged-boundary path and the >=2-step grid (two TCs on v7x).
    B = 200
    x = jax.random.normal(k_x, (B, 20), dtype=jnp.float32)

    out = mlp_forward(x, kparams)
    out = jax.block_until_ready(out)
    assert out.shape == (B, 1)

    # Pure-JAX f32 reference. Kernel uses bf16 MXU inputs with f32
    # accumulation, hence the loosened tolerance.
    (w1, b1), (w2, b2), (w3, b3) = params
    ref = jnp.maximum(x @ w1.T + b1, 0.0)
    ref = jnp.maximum(ref @ w2.T + b2, 0.0)
    ref = ref @ w3.T + b3
    assert jnp.allclose(out, ref, atol=5e-2, rtol=5e-2), (
        float(jnp.max(jnp.abs(out - ref))))

    print("KERNEL_OK")
</pallas_src>

<mosaic_0001>
module attributes {stable_mosaic.version = 11 : i64} {
  func.func @mlp_kernel(%arg0: i32, %arg1: memref<128x20xf32, #tpu.memory_space<vmem>>, %arg2: memref<200x20xbf16, #tpu.memory_space<vmem>>, %arg3: memref<200x1xf32, #tpu.memory_space<vmem>>, %arg4: memref<100x200xbf16, #tpu.memory_space<vmem>>, %arg5: memref<100x1xf32, #tpu.memory_space<vmem>>, %arg6: memref<100x1xf32, #tpu.memory_space<vmem>>, %arg7: memref<1x1xf32, #tpu.memory_space<vmem>>, %arg8: memref<1x128xf32, #tpu.memory_space<vmem>>) attributes {dimension_semantics = [#tpu.dimension_semantics<parallel>], iteration_bounds = array<i64: 2>, scalar_prefetch = 0 : i64, scratch_operands = 0 : i64, tpu.core_type = #tpu.core_type<tc>, window_params = [{transform_indices = @transform_0, window_bounds = array<i64: 128, 20>}, {pipeline_mode = #tpu.pipeline_mode<synchronous>, transform_indices = @transform_1, window_bounds = array<i64: 200, 20>}, {pipeline_mode = #tpu.pipeline_mode<synchronous>, transform_indices = @transform_2, window_bounds = array<i64: 200, 1>}, {pipeline_mode = #tpu.pipeline_mode<synchronous>, transform_indices = @transform_3, window_bounds = array<i64: 100, 200>}, {pipeline_mode = #tpu.pipeline_mode<synchronous>, transform_indices = @transform_4, window_bounds = array<i64: 100, 1>}, {pipeline_mode = #tpu.pipeline_mode<synchronous>, transform_indices = @transform_5, window_bounds = array<i64: 100, 1>}, {pipeline_mode = #tpu.pipeline_mode<synchronous>, transform_indices = @transform_6, window_bounds = array<i64: 1, 1>}, {transform_indices = @transform_7, window_bounds = array<i64: 1, 128>}]} {
    %c0 = arith.constant 0 : index
    %c0_0 = arith.constant 0 : index
    %0 = vector.load %arg1[%c0, %c0_0] : memref<128x20xf32, #tpu.memory_space<vmem>>, vector<128x20xf32>
    %1 = arith.truncf %0 : vector<128x20xf32> to vector<128x20xbf16>
    %c0_1 = arith.constant 0 : index
    %c0_2 = arith.constant 0 : index
    %2 = vector.load %arg2[%c0_1, %c0_2] : memref<200x20xbf16, #tpu.memory_space<vmem>>, vector<200x20xbf16>
    %cst = arith.constant dense<0.000000e+00> : vector<200x128xf32>
    %3 = tpu.matmul %2, %1, %cst {dimension_numbers = #tpu.dot_dimension_numbers<[1], [1], [0], [0], [0, 0, 1, 0], [], []>} : vector<200x20xbf16>, vector<128x20xbf16>, vector<200x128xf32> -> vector<200x128xf32>
    %c0_3 = arith.constant 0 : index
    %c0_4 = arith.constant 0 : index
    %4 = vector.load %arg3[%c0_3, %c0_4] : memref<200x1xf32, #tpu.memory_space<vmem>>, vector<200x1xf32>
    %5 = vector.broadcast %4 : vector<200x1xf32> to vector<200x128xf32>
    %6 = arith.addf %3, %5 : vector<200x128xf32>
    %cst_5 = arith.constant 0.000000e+00 : f32
    %7 = vector.broadcast %cst_5 : f32 to vector<200x128xf32>
    %8 = arith.maximumf %6, %7 : vector<200x128xf32>
    %9 = arith.truncf %8 : vector<200x128xf32> to vector<200x128xbf16>
    %c0_6 = arith.constant 0 : index
    %c0_7 = arith.constant 0 : index
    %10 = vector.load %arg4[%c0_6, %c0_7] : memref<100x200xbf16, #tpu.memory_space<vmem>>, vector<100x200xbf16>
    %cst_8 = arith.constant dense<0.000000e+00> : vector<100x128xf32>
    %11 = tpu.matmul %10, %9, %cst_8 {dimension_numbers = #tpu.dot_dimension_numbers<[1], [0], [0], [1], [0, 0, 1, 1], [], []>} : vector<100x200xbf16>, vector<200x128xbf16>, vector<100x128xf32> -> vector<100x128xf32>
    %c0_9 = arith.constant 0 : index
    %c0_10 = arith.constant 0 : index
    %12 = vector.load %arg5[%c0_9, %c0_10] : memref<100x1xf32, #tpu.memory_space<vmem>>, vector<100x1xf32>
    %13 = vector.broadcast %12 : vector<100x1xf32> to vector<100x128xf32>
    %14 = arith.addf %11, %13 : vector<100x128xf32>
    %cst_11 = arith.constant 0.000000e+00 : f32
    %15 = vector.broadcast %cst_11 : f32 to vector<100x128xf32>
    %16 = arith.maximumf %14, %15 : vector<100x128xf32>
    %c0_12 = arith.constant 0 : index
    %c0_13 = arith.constant 0 : index
    %17 = vector.load %arg6[%c0_12, %c0_13] : memref<100x1xf32, #tpu.memory_space<vmem>>, vector<100x1xf32>
    %18 = vector.broadcast %17 : vector<100x1xf32> to vector<100x128xf32>
    %19 = arith.mulf %18, %16 : vector<100x128xf32>
    %cst_14 = arith.constant dense<0.000000e+00> : vector<128xf32>
    %20 = vector.multi_reduction <add>, %19, %cst_14 [0] : vector<100x128xf32> to vector<128xf32>
    %21 = vector.shape_cast %20 : vector<128xf32> to vector<1x128xf32>
    %c0_15 = arith.constant 0 : index
    %c0_16 = arith.constant 0 : index
    %22 = vector.load %arg7[%c0_15, %c0_16] : memref<1x1xf32, #tpu.memory_space<vmem>>, vector<1x1xf32>
    %23 = vector.broadcast %22 : vector<1x1xf32> to vector<1x128xf32>
    %24 = arith.addf %21, %23 : vector<1x128xf32>
    %c0_17 = arith.constant 0 : index
    %c0_18 = arith.constant 0 : index
    %25 = vector.load %arg8[%c0_17, %c0_18] : memref<1x128xf32, #tpu.memory_space<vmem>>, vector<1x128xf32>
    tpu.vector_store %arg8[%c0_17, %c0_18], %24 {strides = array<i32>} : memref<1x128xf32, #tpu.memory_space<vmem>>, vector<1x128xf32>,
    return
  }
  func.func @transform_0(%arg0: i32) -> (i32, i32) {
    %c0_i32 = arith.constant 0 : i32
    %c0_i32_0 = arith.constant 0 : i32
    return %arg0, %c0_i32 : i32, i32
  }
  func.func @transform_1(%arg0: i32) -> (i32, i32) {
    %c0_i32 = arith.constant 0 : i32
    %c0_i32_0 = arith.constant 0 : i32
    %c0_i32_1 = arith.constant 0 : i32
    return %c0_i32, %c0_i32_0 : i32, i32
  }
  func.func @transform_2(%arg0: i32) -> (i32, i32) {
    %c0_i32 = arith.constant 0 : i32
    %c0_i32_0 = arith.constant 0 : i32
    %c0_i32_1 = arith.constant 0 : i32
    return %c0_i32, %c0_i32_0 : i32, i32
  }
  func.func @transform_3(%arg0: i32) -> (i32, i32) {
    %c0_i32 = arith.constant 0 : i32
    %c0_i32_0 = arith.constant 0 : i32
    %c0_i32_1 = arith.constant 0 : i32
    return %c0_i32, %c0_i32_0 : i32, i32
  }
  func.func @transform_4(%arg0: i32) -> (i32, i32) {
    %c0_i32 = arith.constant 0 : i32
    %c0_i32_0 = arith.constant 0 : i32
    %c0_i32_1 = arith.constant 0 : i32
    return %c0_i32, %c0_i32_0 : i32, i32
  }
  func.func @transform_5(%arg0: i32) -> (i32, i32) {
    %c0_i32 = arith.constant 0 : i32
    %c0_i32_0 = arith.constant 0 : i32
    %c0_i32_1 = arith.constant 0 : i32
    return %c0_i32, %c0_i32_0 : i32, i32
  }
  func.func @transform_6(%arg0: i32) -> (i32, i32) {
    %c0_i32 = arith.constant 0 : i32
    %c0_i32_0 = arith.constant 0 : i32
    %c0_i32_1 = arith.constant 0 : i32
    return %c0_i32, %c0_i32_0 : i32, i32
  }
  func.func @transform_7(%arg0: i32) -> (i32, i32) {
    %c0_i32 = arith.constant 0 : i32
    %c0_i32_0 = arith.constant 0 : i32
    return %c0_i32, %arg0 : i32, i32
  }
}

</mosaic_0001>

<llo_original>
// kernel: tpu_custom_call.1
$region0: #{tpu_custom_call.1}
  #allocation0 [shape = 'u32[]', space=smem, size = 0x4, offset = 0x4, fixed_abs, tag = 'smem constant byte address 0x4 - core index']
  #allocation1 [shape = 'u32[144,128]{1,0:T(1,128)}', space=vmem, size = 0x12000, scoped, tag = 'internal scratch']
  #allocation2 [shape = 'f32[1,1]{1,0:T(1,128)S(1)}', space=vmem, size = 0x200, scoped, tag = 'scoped memory for tpu_custom_call.1']
  %s0 = inlined_call_operand.vmem [shape: f32[200,20], index: 0, kind: input, shape index: {}]
  %s1 = inlined_call_operand.vmem [shape: bf16[200,20], index: 1, kind: input, shape index: {}]
  %s2 = inlined_call_operand.vmem [shape: f32[200,1], index: 2, kind: input, shape index: {}]
  %s3 = inlined_call_operand.vmem [shape: bf16[100,200], index: 3, kind: input, shape index: {}]
  %s4 = inlined_call_operand.vmem [shape: f32[100,1], index: 4, kind: input, shape index: {}]
  %s5 = inlined_call_operand.vmem [shape: f32[100,1], index: 5, kind: input, shape index: {}]
  %s6 = inlined_call_operand.<no memory space> [shape: f32[1,1], index: 6, kind: input, shape index: {}]
  %s7 = inlined_call_operand.hbm [shape: f32[1,200], index: 7, kind: output, shape index: {}]
  %s8 = sld [smem:[#allocation0]]
  $region61: #{tpu_custom_call.1} parent=0
    _
  %s10 = ssub.s32 1, %s8
  %s11 = scalar_select 0, %s10, %s8
  %v12 = vstv %s6
  %13 = vst [vmem:[#allocation2] sm:$0x1] %v12
  $region1: #{tpu_custom_call.1} parent=0
    #allocation3 [shape = 'u8[1024]{0}', space=vmem, size = 0x400, scoped, tag = 'output window, operand 0']
    #allocation4 [shape = 's32[2]{0}', space=sflag, size = 0x8, scoped, tag = 'scoped memory for tpu_custom_call.1']
    %14 = vsyncpa [#allocation4], 0
    %s15 = scalar_lea.sflag [#allocation4], 1
    %16 = vsyncpa %s15, 0
    loop: start=0, step=1, limit=4
    $region2: #{tpu_custom_call.1} parent=1 // loop_pre_header
      _
    $region3: #{tpu_custom_call.1} parent=1 // loop_header
      %s18 = sphi 0, %s22
      %p19 = scmp.ge.s32.totalorder %s18, 4
      %s28 = sphi 0, %s30
      %s31 = sphi 0, %s28
      %s32 = sphi 0, %s31
      %s48 = sphi 0, %s32
      %s52 = sphi 0, %s52
      %s54 = sphi 0, %s52
      %s55 = sphi 0, %s54
      %s69 = sphi 0, %s55
      %s73 = sphi 0, %s73
      %s75 = sphi 0, %s73
      %s76 = sphi 0, %s75
      %s90 = sphi 0, %s76
      %s94 = sphi 0, %s94
      %s96 = sphi 0, %s94
      %s97 = sphi 0, %s96
      %s111 = sphi 0, %s97
      %s115 = sphi 0, %s115
      %s117 = sphi 0, %s115
      %s118 = sphi 0, %s117
      %s132 = sphi 0, %s118
      %s136 = sphi 0, %s136
      %s138 = sphi 0, %s136
      %s139 = sphi 0, %s138
      %s153 = sphi 0, %s139
      %s157 = sphi 0, %s157
      %s159 = sphi 0, %s157
      %s160 = sphi 0, %s159
      %s174 = sphi 0, %s160
      %s180 = sphi 0, %s182
      %s183 = sphi 0, %s180
      %s184 = sphi 0, %s183
      %s200 = sphi 0, %s184
    $region4: #{tpu_custom_call.1} parent=1 // loop_header_branch
      %21 = sbr.rel (%p19) target = $region8
    $region5: #{tpu_custom_call.1} parent=1 // loop_body
      %s23 = ssub.s32 %s18, 1
      %s24 = ssub.s32 %s18, 2
      %s25 = sadd.s32 %s18, 1
      %s26 = ssub.s32 %s18, %s25
      %p27 = scmp.eq.s32.totalorder %s26, 0
      %s29 = sadd.s32 %s28, 1
      %s30 = scalar_select %p27, %s28, %s29
      %p33 = pneg %p27
      %p34 = scmp.eq.s32.totalorder %s18, 1
      %p35 = por %p33, %p34
      %p36 = scmp.ne.s32.totalorder %s28, %s31
      %p37 = scmp.eq.s32.totalorder %s18, 0
      %p38 = por %p36, %p37
      %p39 = scmp.ne.s32.totalorder %s28, %s31
      %p40 = scmp.eq.s32.totalorder %s23, 1
      %p41 = por %p39, %p40
      %p42 = scmp.ne.s32.totalorder %s31, %s32
      %p43 = scmp.eq.s32.totalorder %s23, 0
      %p44 = por %p42, %p43
      %p45 = scmp.ne.s32.totalorder %s31, %s32
      %p46 = scmp.eq.s32.totalorder %s24, 1
      %p47 = por %p45, %p46
      %p49 = scmp.ne.s32.totalorder %s32, %s48
      %p50 = scmp.eq.s32.totalorder %s24, 0
      %p51 = por %p49, %p50
      %s53 = sadd.s32 %s52, 1
      %p56 = scmp.eq.s32.totalorder %s18, 1
      %p57 = scmp.ne.s32.totalorder %s52, %s54
      %p58 = scmp.eq.s32.totalorder %s18, 0
      %p59 = por %p57, %p58
      %p60 = scmp.ne.s32.totalorder %s52, %s54
      %p61 = scmp.eq.s32.totalorder %s23, 1
      %p62 = por %p60, %p61
      %p63 = scmp.ne.s32.totalorder %s54, %s55
      %p64 = scmp.eq.s32.totalorder %s23, 0
      %p65 = por %p63, %p64
      %p66 = scmp.ne.s32.totalorder %s54, %s55
      %p67 = scmp.eq.s32.totalorder %s24, 1
      %p68 = por %p66, %p67
      %p70 = scmp.ne.s32.totalorder %s55, %s69
      %p71 = scmp.eq.s32.totalorder %s24, 0
      %p72 = por %p70, %p71
      %s74 = sadd.s32 %s73, 1
      %p77 = scmp.eq.s32.totalorder %s18, 1
      %p78 = scmp.ne.s32.totalorder %s73, %s75
      %p79 = scmp.eq.s32.totalorder %s18, 0
      %p80 = por %p78, %p79
      %p81 = scmp.ne.s32.totalorder %s73, %s75
      %p82 = scmp.eq.s32.totalorder %s23, 1
      %p83 = por %p81, %p82
      %p84 = scmp.ne.s32.totalorder %s75, %s76
      %p85 = scmp.eq.s32.totalorder %s23, 0
      %p86 = por %p84, %p85
      %p87 = scmp.ne.s32.totalorder %s75, %s76
      %p88 = scmp.eq.s32.totalorder %s24, 1
      %p89 = por %p87, %p88
      %p91 = scmp.ne.s32.totalorder %s76, %s90
      %p92 = scmp.eq.s32.totalorder %s24, 0
      %p93 = por %p91, %p92
      %s95 = sadd.s32 %s94, 1
      %p98 = scmp.eq.s32.totalorder %s18, 1
      %p99 = scmp.ne.s32.totalorder %s94, %s96
      %p100 = scmp.eq.s32.totalorder %s18, 0
      %p101 = por %p99, %p100
      %p102 = scmp.ne.s32.totalorder %s94, %s96
      %p103 = scmp.eq.s32.totalorder %s23, 1
      %p104 = por %p102, %p103
      %p105 = scmp.ne.s32.totalorder %s96, %s97
      %p106 = scmp.eq.s32.totalorder %s23, 0
      %p107 = por %p105, %p106
      %p108 = scmp.ne.s32.totalorder %s96, %s97
      %p109 = scmp.eq.s32.totalorder %s24, 1
      %p110 = por %p108, %p109
      %p112 = scmp.ne.s32.totalorder %s97, %s111
      %p113 = scmp.eq.s32.totalorder %s24, 0
      %p114 = por %p112, %p113
      %s116 = sadd.s32 %s115, 1
      %p119 = scmp.eq.s32.totalorder %s18, 1
      %p120 = scmp.ne.s32.totalorder %s115, %s117
      %p121 = scmp.eq.s32.totalorder %s18, 0
      %p122 = por %p120, %p121
      %p123 = scmp.ne.s32.totalorder %s115, %s117
      %p124 = scmp.eq.s32.totalorder %s23, 1
      %p125 = por %p123, %p124
      %p126 = scmp.ne.s32.totalorder %s117, %s118
      %p127 = scmp.eq.s32.totalorder %s23, 0
      %p128 = por %p126, %p127
      %p129 = scmp.ne.s32.totalorder %s117, %s118
      %p130 = scmp.eq.s32.totalorder %s24, 1
      %p131 = por %p129, %p130
      %p133 = scmp.ne.s32.totalorder %s118, %s132
      %p134 = scmp.eq.s32.totalorder %s24, 0
      %p135 = por %p133, %p134
      %s137 = sadd.s32 %s136, 1
      %p140 = scmp.eq.s32.totalorder %s18, 1
      %p141 = scmp.ne.s32.totalorder %s136, %s138
      %p142 = scmp.eq.s32.totalorder %s18, 0
      %p143 = por %p141, %p142
      %p144 = scmp.ne.s32.totalorder %s136, %s138
      %p145 = scmp.eq.s32.totalorder %s23, 1
      %p146 = por %p144, %p145
      %p147 = scmp.ne.s32.totalorder %s138, %s139
      %p148 = scmp.eq.s32.totalorder %s23, 0
      %p149 = por %p147, %p148
      %p150 = scmp.ne.s32.totalorder %s138, %s139
      %p151 = scmp.eq.s32.totalorder %s24, 1
      %p152 = por %p150, %p151
      %p154 = scmp.ne.s32.totalorder %s139, %s153
      %p155 = scmp.eq.s32.totalorder %s24, 0
      %p156 = por %p154, %p155
      %s158 = sadd.s32 %s157, 1
      %p161 = scmp.eq.s32.totalorder %s18, 1
      %p162 = scmp.ne.s32.totalorder %s157, %s159
      %p163 = scmp.eq.s32.totalorder %s18, 0
      %p164 = por %p162, %p163
      %p165 = scmp.ne.s32.totalorder %s157, %s159
      %p166 = scmp.eq.s32.totalorder %s23, 1
      %p167 = por %p165, %p166
      %p168 = scmp.ne.s32.totalorder %s159, %s160
      %p169 = scmp.eq.s32.totalorder %s23, 0
      %p170 = por %p168, %p169
      %p171 = scmp.ne.s32.totalorder %s159, %s160
      %p172 = scmp.eq.s32.totalorder %s24, 1
      %p173 = por %p171, %p172
      %p175 = scmp.ne.s32.totalorder %s160, %s174
      %p176 = scmp.eq.s32.totalorder %s24, 0
      %p177 = por %p175, %p176
      %s178 = ssub.s32 %s18, %s25
      %p179 = scmp.eq.s32.totalorder %s178, 0
      %s181 = sadd.s32 %s180, 1
      %s182 = scalar_select %p179, %s180, %s181
      %p185 = pneg %p179
      %p186 = scmp.eq.s32.totalorder %s18, 1
      %p187 = por %p185, %p186
      %p188 = scmp.ne.s32.totalorder %s180, %s183
      %p189 = scmp.eq.s32.totalorder %s18, 0
      %p190 = por %p188, %p189
      %p191 = scmp.ne.s32.totalorder %s180, %s183
      %p192 = scmp.eq.s32.totalorder %s23, 1
      %p193 = por %p191, %p192
      %p194 = scmp.ne.s32.totalorder %s183, %s184
      %p195 = scmp.eq.s32.totalorder %s23, 0
      %p196 = por %p194, %p195
      %p197 = scmp.ne.s32.totalorder %s183, %s184
      %p198 = scmp.eq.s32.totalorder %s24, 1
      %p199 = por %p197, %p198
      %p201 = scmp.ne.s32.totalorder %s184, %s200
      %p202 = scmp.eq.s32.totalorder %s24, 0
      %p203 = por %p201, %p202
      %p204 = scmp.le.s32.totalorder 1, %s18
      %p205 = scmp.lt.s32.totalorder %s18, 3
      %p206 = pnand %p204, %p205
      %p207 = pneg %p206
      // Predicated region
      $region9: #{tpu_custom_call.1} parent=5 // pred_check
        _
      $region10: #{tpu_custom_call.1} parent=5 // pred_check_branch
        %209 = sbr.rel (%p206) target = $region12
      $region11: #{tpu_custom_call.1} parent=5 // pred_region
        %s210 = ssub.s32 %s18, 1
        // Predicated region
        $region13: #{tpu_custom_call.1} parent=11 // pred_check
          %p211 = pneg %p65
        $region14: #{tpu_custom_call.1} parent=11 // pred_check_branch
          %213 = sbr.rel (%p211) target = $region16
        $region15: #{tpu_custom_call.1} parent=11 // pred_region
          _
        $region16: #{tpu_custom_call.1} parent=11 // pred_fallthru
          _
        // Predicated region
        $region17: #{tpu_custom_call.1} parent=11 // pred_check
          %p214 = pneg %p86
        $region18: #{tpu_custom_call.1} parent=11 // pred_check_branch
          %216 = sbr.rel (%p214) target = $region20
        $region19: #{tpu_custom_call.1} parent=11 // pred_region
          _
        $region20: #{tpu_custom_call.1} parent=11 // pred_fallthru
          _
        // Predicated region
        $region21: #{tpu_custom_call.1} parent=11 // pred_check
          %p217 = pneg %p107
        $region22: #{tpu_custom_call.1} parent=11 // pred_check_branch
          %219 = sbr.rel (%p217) target = $region24
        $region23: #{tpu_custom_call.1} parent=11 // pred_region
          _
        $region24: #{tpu_custom_call.1} parent=11 // pred_fallthru
          _
        // Predicated region
        $region25: #{tpu_custom_call.1} parent=11 // pred_check
          %p220 = pneg %p128
        $region26: #{tpu_custom_call.1} parent=11 // pred_check_branch
          %222 = sbr.rel (%p220) target = $region28
        $region27: #{tpu_custom_call.1} parent=11 // pred_region
          _
        $region28: #{tpu_custom_call.1} parent=11 // pred_fallthru
          _
        // Predicated region
        $region29: #{tpu_custom_call.1} parent=11 // pred_check
          %p223 = pneg %p149
        $region30: #{tpu_custom_call.1} parent=11 // pred_check_branch
          %225 = sbr.rel (%p223) target = $region32
        $region31: #{tpu_custom_call.1} parent=11 // pred_region
          _
        $region32: #{tpu_custom_call.1} parent=11 // pred_fallthru
          _
        // Predicated region
        $region33: #{tpu_custom_call.1} parent=11 // pred_check
          %p226 = pneg %p170
        $region34: #{tpu_custom_call.1} parent=11 // pred_check_branch
          %228 = sbr.rel (%p226) target = $region36
        $region35: #{tpu_custom_call.1} parent=11 // pred_region
          _
        $region36: #{tpu_custom_call.1} parent=11 // pred_fallthru
          _
      $region12: #{tpu_custom_call.1} parent=5 // pred_fallthru
        _
      %p229 = scmp.lt.s32.totalorder %s18, 2
      // Predicated region
      $region37: #{tpu_custom_call.1} parent=5 // pred_check
        %p230 = pneg %p229
      $region38: #{tpu_custom_call.1} parent=5 // pred_check_branch
        %232 = sbr.rel (%p230) target = $region40
      $region39: #{tpu_custom_call.1} parent=5 // pred_region
        // Predicated region
        $region41: #{tpu_custom_call.1} parent=39 // pred_check
          %p233 = pneg %p38
        $region42: #{tpu_custom_call.1} parent=39 // pred_check_branch
          %235 = sbr.rel (%p233) target = $region44
        $region43: #{tpu_custom_call.1} parent=39 // pred_region
          %s236 = smul.u32 16, %s18
          %s237 = ssub.s32 25, %s236
          %p238 = scmp.lt.s32.totalorder %s237, 16
          %s239 = scalar_select %p238, %s237, 16
          %s240 = smul.u32 128, %s239
          %p241 = scmp.lt.s32.totalorder %s236, 24
          %s242 = scalar_select %p241, %s236, 24
          %s243 = smul.addr %s242, 8
          %s244 = scalar_lea.vmem %s0, %s243
          %s245 = smul.u32 16, %s18
          %s246 = ssub.s32 25, %s245
          %p247 = scmp.lt.s32.totalorder %s246, 16
          %s248 = scalar_select %p247, %s246, 16
          %s249 = smul.u32 128, %s248
        $region44: #{tpu_custom_call.1} parent=39 // pred_fallthru
          _
      $region40: #{tpu_custom_call.1} parent=5 // pred_fallthru
        _
      %p250 = scmp.le.s32.totalorder 1, %s18
      %p251 = scmp.lt.s32.totalorder %s18, 3
      %p252 = pnand %p250, %p251
      %p253 = pneg %p252
      // Predicated region
      $region45: #{tpu_custom_call.1} parent=5 // pred_check
        _
      $region46: #{tpu_custom_call.1} parent=5 // pred_check_branch
        %255 = sbr.rel (%p252) target = $region48
      $region47: #{tpu_custom_call.1} parent=5 // pred_region
        %s256 = ssub.s32 %s18, 1
        %s257 = smul.u32 16, %s23
        %s258 = ssub.s32 25, %s257
        %p259 = scmp.lt.s32.totalorder %s258, 16
        %s260 = scalar_select %p259, %s258, 16
        %s261 = smul.u32 128, %s260
        %p262 = scmp.lt.s32.totalorder %s257, 24
        %s263 = scalar_select %p262, %s257, 24
        %s264 = smul.addr %s263, 8
        %s265 = scalar_lea.vmem %s0, %s264
        %p266 = pneg %p44
        %p267 = pneg %p41
        %p268 = pneg %p65
        %p269 = pneg %p62
        %p270 = pneg %p86
        %p271 = pneg %p83
        %p272 = pneg %p107
        %p273 = pneg %p104
        %p274 = pneg %p128
        %p275 = pneg %p125
        %p276 = pneg %p149
        %p277 = pneg %p146
        %p278 = pneg %p170
        %p279 = pneg %p167
        %p280 = pneg %p196
        %p281 = pneg %p193
        %s282 = sand.u32 %s183, 1
        %s283 = scalar_lea.sflag [#allocation4], %s282
        %s284 = sand.u32 %s183, 1
        %s285 = scalar_lea.vmem [#allocation3], %s284
        %s286 = smul.u32 16, %s23
        %s287 = ssub.s32 25, %s286
        %p288 = scmp.lt.s32.totalorder %s287, 16
        %s289 = scalar_select %p288, %s287, 16
        %s290 = smul.u32 128, %s289
        %p291 = scmp.lt.s32.totalorder %s286, 24
        %s292 = scalar_select %p291, %s286, 24
        %s293 = smul.addr %s292, 8
        %s294 = scalar_lea.vmem %s0, %s293
        %s295 = smul.u32 16, %s23
        %s296 = ssub.s32 25, %s295
        %p297 = scmp.lt.s32.totalorder %s296, 16
        %s298 = scalar_select %p297, %s296, 16
        %s299 = smul.u32 128, %s298
        %v301 = vld [vmem:[%s294] sm:$0xff]
        %v302 = vld [vmem:[%s294 + $0x8] sm:$0xff]
        %v303 = vld [vmem:[%s294 + $0x10] sm:$0xff]
        %v304 = vld [vmem:[%s294 + $0x18] sm:$0xff]
        %v305 = vld [vmem:[%s294 + $0x20] sm:$0xff]
        %v306 = vld [vmem:[%s294 + $0x28] sm:$0xff]
        %v307 = vld [vmem:[%s294 + $0x30] sm:$0xff]
        %v308 = vld [vmem:[%s294 + $0x38] sm:$0xff]
        %v309 = vld [vmem:[%s294 + $0x40] sm:$0xff]
        %v310 = vld [vmem:[%s294 + $0x48] sm:$0xff]
        %v311 = vld [vmem:[%s294 + $0x50] sm:$0xff]
        %v312 = vld [vmem:[%s294 + $0x58] sm:$0xff]
        %v313 = vld [vmem:[%s294 + $0x60] sm:$0xff]
        %v314 = vld [vmem:[%s294 + $0x68] sm:$0xff]
        %v315 = vld [vmem:[%s294 + $0x70] sm:$0xff]
        %v316 = vld [vmem:[%s294 + $0x78] sm:$0xff]
        %v317 = vpack.c.bf16 %v302, %v301
        %v318 = vpack.c.bf16 %v304, %v303
        %v319 = vpack.c.bf16 %v306, %v305
        %v320 = vpack.c.bf16 %v308, %v307
        %v321 = vpack.c.bf16 %v310, %v309
        %v322 = vpack.c.bf16 %v312, %v311
        %v323 = vpack.c.bf16 %v314, %v313
        %v324 = vpack.c.bf16 %v316, %v315
        %v325 = vld [vmem:[%s1] sm:$0xf]
        %v326 = vld [vmem:[%s1 + $0x4] sm:$0xf]
        %v327 = vld [vmem:[%s1 + $0x8] sm:$0xf]
        %v328 = vld [vmem:[%s1 + $0xc] sm:$0xf]
        %v329 = vld [vmem:[%s1 + $0x10] sm:$0xf]
        %v330 = vld [vmem:[%s1 + $0x14] sm:$0xf]
        %v331 = vld [vmem:[%s1 + $0x18] sm:$0xf]
        %v332 = vld [vmem:[%s1 + $0x1c] sm:$0xf]
        %v333 = vld [vmem:[%s1 + $0x20] sm:$0xf]
        %v334 = vld [vmem:[%s1 + $0x24] sm:$0xf]
        %v335 = vld [vmem:[%s1 + $0x28] sm:$0xf]
        %v336 = vld [vmem:[%s1 + $0x2c] sm:$0xf]
        %v337 = vld [vmem:[%s1 + $0x30] sm:$0xf]
        %v338 = vld [vmem:[%s1 + $0x34] sm:$0xf]
        %v339 = vld [vmem:[%s1 + $0x38] sm:$0xf]
        %v340 = vld [vmem:[%s1 + $0x3c] sm:$0xf]
        %v341 = vld [vmem:[%s1 + $0x40] sm:$0xf]
        %v342 = vld [vmem:[%s1 + $0x44] sm:$0xf]
        %v343 = vld [vmem:[%s1 + $0x48] sm:$0xf]
        %v344 = vld [vmem:[%s1 + $0x4c] sm:$0xf]
        %v345 = vld [vmem:[%s1 + $0x50] sm:$0xf]
        %v346 = vld [vmem:[%s1 + $0x54] sm:$0xf]
        %v347 = vld [vmem:[%s1 + $0x58] sm:$0xf]
        %v348 = vld [vmem:[%s1 + $0x5c] sm:$0xf]
        %v349 = vld [vmem:[%s1 + $0x60] sm:$0xf]
        %v350 = vld [vmem:[%s2] sm:$0xff]
        %v351 = vld [vmem:[%s2 + $0x8] sm:$0xff]
        %v352 = vld [vmem:[%s2 + $0x10] sm:$0xff]
        %v353 = vld [vmem:[%s2 + $0x18] sm:$0xff]
        %v354 = vld [vmem:[%s2 + $0x20] sm:$0xff]
        %v355 = vld [vmem:[%s2 + $0x28] sm:$0xff]
        %v356 = vld [vmem:[%s2 + $0x30] sm:$0xff]
        %v357 = vld [vmem:[%s2 + $0x38] sm:$0xff]
        %v358 = vld [vmem:[%s2 + $0x40] sm:$0xff]
        %v359 = vld [vmem:[%s2 + $0x48] sm:$0xff]
        %v360 = vld [vmem:[%s2 + $0x50] sm:$0xff]
        %v361 = vld [vmem:[%s2 + $0x58] sm:$0xff]
        %v362 = vld [vmem:[%s2 + $0x60] sm:$0xff]
        %v363 = vld [vmem:[%s2 + $0x68] sm:$0xff]
        %v364 = vld [vmem:[%s2 + $0x70] sm:$0xff]
        %v365 = vld [vmem:[%s2 + $0x78] sm:$0xff]
        %v366 = vld [vmem:[%s2 + $0x80] sm:$0xff]
        %v367 = vld [vmem:[%s2 + $0x88] sm:$0xff]
        %v368 = vld [vmem:[%s2 + $0x90] sm:$0xff]
        %v369 = vld [vmem:[%s2 + $0x98] sm:$0xff]
        %v370 = vld [vmem:[%s2 + $0xa0] sm:$0xff]
        %v371 = vld [vmem:[%s2 + $0xa8] sm:$0xff]
        %v372 = vld [vmem:[%s2 + $0xb0] sm:$0xff]
        %v373 = vld [vmem:[%s2 + $0xb8] sm:$0xff]
        %v374 = vld [vmem:[%s2 + $0xc0] sm:$0xff]
        %376 = vset.pattern.permute.xlu0 0
        %377 = vperm.xlu0 %376, %v350
        %v378 = vpop.permute.xlu0 %377
        %381 = vset.pattern.permute.xlu0 0
        %382 = vperm.xlu0 %381, %v351
        %v383 = vpop.permute.xlu0 %382
        %386 = vset.pattern.permute.xlu0 0
        %387 = vperm.xlu0 %386, %v352
        %v388 = vpop.permute.xlu0 %387
        %391 = vset.pattern.permute.xlu0 0
        %392 = vperm.xlu0 %391, %v353
        %v393 = vpop.permute.xlu0 %392
        %396 = vset.pattern.permute.xlu0 0
        %397 = vperm.xlu0 %396, %v354
        %v398 = vpop.permute.xlu0 %397
        %401 = vset.pattern.permute.xlu0 0
        %402 = vperm.xlu0 %401, %v355
        %v403 = vpop.permute.xlu0 %402
        %406 = vset.pattern.permute.xlu0 0
        %407 = vperm.xlu0 %406, %v356
        %v408 = vpop.permute.xlu0 %407
        %411 = vset.pattern.permute.xlu0 0
        %412 = vperm.xlu0 %411, %v357
        %v413 = vpop.permute.xlu0 %412
        %416 = vset.pattern.permute.xlu0 0
        %417 = vperm.xlu0 %416, %v358
        %v418 = vpop.permute.xlu0 %417
        %421 = vset.pattern.permute.xlu0 0
        %422 = vperm.xlu0 %421, %v359
        %v423 = vpop.permute.xlu0 %422
        %426 = vset.pattern.permute.xlu0 0
        %427 = vperm.xlu0 %426, %v360
        %v428 = vpop.permute.xlu0 %427
        %431 = vset.pattern.permute.xlu0 0
        %432 = vperm.xlu0 %431, %v361
        %v433 = vpop.permute.xlu0 %432
        %436 = vset.pattern.permute.xlu0 0
        %437 = vperm.xlu0 %436, %v362
        %v438 = vpop.permute.xlu0 %437
        %441 = vset.pattern.permute.xlu0 0
        %442 = vperm.xlu0 %441, %v363
        %v443 = vpop.permute.xlu0 %442
        %446 = vset.pattern.permute.xlu0 0
        %447 = vperm.xlu0 %446, %v364
        %v448 = vpop.permute.xlu0 %447
        %451 = vset.pattern.permute.xlu0 0
        %452 = vperm.xlu0 %451, %v365
        %v453 = vpop.permute.xlu0 %452
        %456 = vset.pattern.permute.xlu0 0
        %457 = vperm.xlu0 %456, %v366
        %v458 = vpop.permute.xlu0 %457
        %461 = vset.pattern.permute.xlu0 0
        %462 = vperm.xlu0 %461, %v367
        %v463 = vpop.permute.xlu0 %462
        %466 = vset.pattern.permute.xlu0 0
        %467 = vperm.xlu0 %466, %v368
        %v468 = vpop.permute.xlu0 %467
        %471 = vset.pattern.permute.xlu0 0
        %472 = vperm.xlu0 %471, %v369
        %v473 = vpop.permute.xlu0 %472
        %476 = vset.pattern.permute.xlu0 0
        %477 = vperm.xlu0 %476, %v370
        %v478 = vpop.permute.xlu0 %477
        %481 = vset.pattern.permute.xlu0 0
        %482 = vperm.xlu0 %481, %v371
        %v483 = vpop.permute.xlu0 %482
        %486 = vset.pattern.permute.xlu0 0
        %487 = vperm.xlu0 %486, %v372
        %v488 = vpop.permute.xlu0 %487
        %491 = vset.pattern.permute.xlu0 0
        %492 = vperm.xlu0 %491, %v373
        %v493 = vpop.permute.xlu0 %492
        %496 = vset.pattern.permute.xlu0 0
        %497 = vperm.xlu0 %496, %v374
        %v498 = vpop.permute.xlu0 %497
        %v525 = vunpack.c.l.b16 %v325
        %v526 = vunpack.c.l.b16 %v326
        %v527 = vunpack.c.l.b16 %v327
        %v528 = vunpack.c.l.b16 %v328
        %v529 = vunpack.c.l.b16 %v329
        %v530 = vunpack.c.l.b16 %v330
        %v531 = vunpack.c.l.b16 %v331
        %v532 = vunpack.c.l.b16 %v332
        %v533 = vunpack.c.l.b16 %v333
        %v534 = vunpack.c.l.b16 %v334
        %v535 = vunpack.c.l.b16 %v335
        %v536 = vunpack.c.l.b16 %v336
        %v537 = vunpack.c.l.b16 %v337
        %v538 = vunpack.c.l.b16 %v338
        %v539 = vunpack.c.l.b16 %v339
        %v540 = vunpack.c.l.b16 %v340
        %v541 = vunpack.c.l.b16 %v341
        %v542 = vunpack.c.l.b16 %v342
        %v543 = vunpack.c.l.b16 %v343
        %v544 = vunpack.c.l.b16 %v344
        %v545 = vunpack.c.l.b16 %v345
        %v546 = vunpack.c.l.b16 %v346
        %v547 = vunpack.c.l.b16 %v347
        %v548 = vunpack.c.l.b16 %v348
        %v549 = vunpack.c.l.b16 %v349
        %v550 = vpack.c.b16 %v526, %v525
        %v551 = vpack.c.b16 %v528, %v527
        %v552 = vpack.c.b16 %v530, %v529
        %v553 = vpack.c.b16 %v532, %v531
        %v554 = vpack.c.b16 %v534, %v533
        %v555 = vpack.c.b16 %v536, %v535
        %v556 = vpack.c.b16 %v538, %v537
        %v557 = vpack.c.b16 %v540, %v539
        %v558 = vpack.c.b16 %v542, %v541
        %v559 = vpack.c.b16 %v544, %v543
        %v560 = vpack.c.b16 %v546, %v545
        %v561 = vpack.c.b16 %v548, %v547
        %v562 = vpack.c.b16 %v549, %v549
        %vm563 = vcmask 162816
        %v565 = vsel %vm563, %v550, 0
        %v568 = vsel %vm563, %v551, 0
        %v571 = vsel %vm563, %v552, 0
        %v574 = vsel %vm563, %v553, 0
        %v577 = vsel %vm563, %v554, 0
        %v580 = vsel %vm563, %v555, 0
        %v583 = vsel %vm563, %v556, 0
        %v586 = vsel %vm563, %v557, 0
        %v589 = vsel %vm563, %v558, 0
        %v592 = vsel %vm563, %v559, 0
        %v595 = vsel %vm563, %v560, 0
        %v598 = vsel %vm563, %v561, 0
        %v601 = vsel %vm563, %v562, 0
        %v604 = vsel %vm563, %v317, 0
        %v607 = vsel %vm563, %v318, 0
        %v610 = vsel %vm563, %v319, 0
        %v613 = vsel %vm563, %v320, 0
        %v616 = vsel %vm563, %v321, 0
        %v619 = vsel %vm563, %v322, 0
        %v622 = vsel %vm563, %v323, 0
        %v625 = vsel %vm563, %v324, 0
        %627 = vmatprep.subr.bf16.mxu0 0
        %628 = vmatpush1.bf16.xpose.msra.mxu0 %v604
        %629 = vmatprep.subr.bf16.mxu0 0
        %630 = vmatpush1.bf16.xpose.msra.mxu0 %v607
        %631 = vmatprep.subr.bf16.mxu0 0
        %632 = vmatpush1.bf16.xpose.msra.mxu0 %v610
        %633 = vmatprep.subr.bf16.mxu0 0
        %634 = vmatpush1.bf16.xpose.msra.mxu0 %v613
        %635 = vmatprep.subr.bf16.mxu0 0
        %636 = vmatpush1.bf16.xpose.msra.mxu0 %v616
        %637 = vmatprep.subr.bf16.mxu0 0
        %638 = vmatpush1.bf16.xpose.msra.mxu0 %v619
        %639 = vmatprep.subr.bf16.mxu0 0
        %640 = vmatpush1.bf16.xpose.msra.mxu0 %v622
        %641 = vmatprep.subr.bf16.mxu0 0
        %642 = vmatpush1.bf16.xpose.msra.mxu0 %v625
        %643 = vmatprep.subr.bf16.mxu0 0
        %644 = vmatpush1.bf16.xpose.msra.mxu0 0
        %645 = vmatprep.subr.bf16.mxu0 0
        %646 = vmatpush1.bf16.xpose.msra.mxu0 0
        %647 = vmatprep.subr.bf16.mxu0 0
        %648 = vmatpush1.bf16.xpose.msra.mxu0 0
        %649 = vmatprep.subr.bf16.mxu0 0
        %650 = vmatpush1.bf16.xpose.msra.mxu0 0
        %651 = vmatprep.subr.bf16.mxu0 0
        %652 = vmatpush1.bf16.xpose.msra.mxu0 0
        %653 = vmatprep.subr.bf16.mxu0 0
        %654 = vmatpush1.bf16.xpose.msra.mxu0 0
        %655 = vmatprep.subr.bf16.mxu0 0
        %656 = vmatpush1.bf16.xpose.msra.mxu0 0
        %657 = vmatprep.subr.bf16.mxu0 0
        %658 = vmatpush1.bf16.xpose.msra.mxu0 0
        %659 = vmatprep.mubr.bf16.mxu0 0
        %660 = vmatmul.mubr.bf16.gmra.mrb[0].mxu0 %v565
        %v661 = vpop.f32.mrb[0].mxu0
        %v662 = vadd.f32 %v378, %v661
        %v663 = vpop.f32.mrb[0].mxu0
        %v664 = vpop.f32.mrb[0].mxu0
        %v665 = vadd.f32 %v383, %v664
        %v666 = vpop.f32.mrb[0].mxu0
        %667 = vmatprep.mubr.bf16.mxu0 0
        %668 = vmatmul.mubr.bf16.gmra.mrb[0].mxu0 %v568
        %v669 = vpop.f32.mrb[0].mxu0
        %v670 = vadd.f32 %v388, %v669
        %v671 = vpop.f32.mrb[0].mxu0
        %v672 = vpop.f32.mrb[0].mxu0
        %v673 = vadd.f32 %v393, %v672
        %v674 = vpop.f32.mrb[0].mxu0
        %675 = vmatprep.mubr.bf16.mxu0 0
        %676 = vmatmul.mubr.bf16.gmra.mrb[0].mxu0 %v571
        %v677 = vpop.f32.mrb[0].mxu0
        %v678 = vadd.f32 %v398, %v677
        %v679 = vpop.f32.mrb[0].mxu0
        %v680 = vpop.f32.mrb[0].mxu0
        %v681 = vadd.f32 %v403, %v680
        %v682 = vpop.f32.mrb[0].mxu0
        %683 = vmatprep.mubr.bf16.mxu0 0
        %684 = vmatmul.mubr.bf16.gmra.mrb[0].mxu0 %v574
        %v685 = vpop.f32.mrb[0].mxu0
        %v686 = vadd.f32 %v408, %v685
        %v687 = vpop.f32.mrb[0].mxu0
        %v688 = vpop.f32.mrb[0].mxu0
        %v689 = vadd.f32 %v413, %v688
        %v690 = vpop.f32.mrb[0].mxu0
        %691 = vmatprep.mubr.bf16.mxu0 0
        %692 = vmatmul.mubr.bf16.gmra.mrb[0].mxu0 %v577
        %v693 = vpop.f32.mrb[0].mxu0
        %v694 = vadd.f32 %v418, %v693
        %v695 = vpop.f32.mrb[0].mxu0
        %v696 = vpop.f32.mrb[0].mxu0
        %v697 = vadd.f32 %v423, %v696
        %v698 = vpop.f32.mrb[0].mxu0
        %699 = vmatprep.mubr.bf16.mxu0 0
        %700 = vmatmul.mubr.bf16.gmra.mrb[0].mxu0 %v580
        %v701 = vpop.f32.mrb[0].mxu0
        %v702 = vadd.f32 %v428, %v701
        %v703 = vpop.f32.mrb[0].mxu0
        %v704 = vpop.f32.mrb[0].mxu0
        %v705 = vadd.f32 %v433, %v704
        %v706 = vpop.f32.mrb[0].mxu0
        %707 = vmatprep.mubr.bf16.mxu0 0
        %708 = vmatmul.mubr.bf16.gmra.mrb[0].mxu0 %v583
        %v709 = vpop.f32.mrb[0].mxu0
        %v710 = vadd.f32 %v438, %v709
        %v711 = vpop.f32.mrb[0].mxu0
        %v712 = vpop.f32.mrb[0].mxu0
        %v713 = vadd.f32 %v443, %v712
        %v714 = vpop.f32.mrb[0].mxu0
        %715 = vmatprep.mubr.bf16.mxu0 0
        %716 = vmatmul.mubr.bf16.gmra.mrb[0].mxu0 %v586
        %v717 = vpop.f32.mrb[0].mxu0
        %v718 = vadd.f32 %v448, %v717
        %v719 = vpop.f32.mrb[0].mxu0
        %v720 = vpop.f32.mrb[0].mxu0
        %v721 = vadd.f32 %v453, %v720
        %v722 = vpop.f32.mrb[0].mxu0
        %723 = vmatprep.mubr.bf16.mxu0 0
        %724 = vmatmul.mubr.bf16.gmra.mrb[0].mxu0 %v589
        %v725 = vpop.f32.mrb[0].mxu0
        %v726 = vadd.f32 %v458, %v725
        %v727 = vpop.f32.mrb[0].mxu0
        %v728 = vpop.f32.mrb[0].mxu0
        %v729 = vadd.f32 %v463, %v728
        %v730 = vpop.f32.mrb[0].mxu0
        %731 = vmatprep.mubr.bf16.mxu0 0
        %732 = vmatmul.mubr.bf16.gmra.mrb[0].mxu0 %v592
        %v733 = vpop.f32.mrb[0].mxu0
        %v734 = vadd.f32 %v468, %v733
        %v735 = vpop.f32.mrb[0].mxu0
        %v736 = vpop.f32.mrb[0].mxu0
        %v737 = vadd.f32 %v473, %v736
        %v738 = vpop.f32.mrb[0].mxu0
        %739 = vmatprep.mubr.bf16.mxu0 0
        %740 = vmatmul.mubr.bf16.gmra.mrb[0].mxu0 %v595
        %v741 = vpop.f32.mrb[0].mxu0
        %v742 = vadd.f32 %v478, %v741
        %v743 = vpop.f32.mrb[0].mxu0
        %v744 = vpop.f32.mrb[0].mxu0
        %v745 = vadd.f32 %v483, %v744
        %v746 = vpop.f32.mrb[0].mxu0
        %747 = vmatprep.mubr.bf16.mxu0 0
        %748 = vmatmul.mubr.bf16.gmra.mrb[0].mxu0 %v598
        %v749 = vpop.f32.mrb[0].mxu0
        %v750 = vadd.f32 %v488, %v749
        %v751 = vpop.f32.mrb[0].mxu0
        %v752 = vpop.f32.mrb[0].mxu0
        %v753 = vadd.f32 %v493, %v752
        %v754 = vpop.f32.mrb[0].mxu0
        %755 = vmatprep.mubr.bf16.mxu0 0
        %756 = vmatmul.mubr.bf16.gmra.mrb[0].mxu0 %v601
        %v757 = vpop.f32.mrb[0].mxu0
        %v758 = vadd.f32 %v498, %v757
        %v759 = vpop.f32.mrb[0].mxu0
        %v760 = vpop.f32.mrb[0].mxu0
        %v761 = vpop.f32.mrb[0].mxu0
        %762 = vdwg.mxu0
        %v763 = vmax.f32 %v662, 0.0
        %v764 = vmax.f32 %v665, 0.0
        %v765 = vmax.f32 %v670, 0.0
        %v766 = vmax.f32 %v673, 0.0
        %v767 = vmax.f32 %v678, 0.0
        %v768 = vmax.f32 %v681, 0.0
        %v769 = vmax.f32 %v686, 0.0
        %v770 = vmax.f32 %v689, 0.0
        %v771 = vmax.f32 %v694, 0.0
        %v772 = vmax.f32 %v697, 0.0
        %v773 = vmax.f32 %v702, 0.0
        %v774 = vmax.f32 %v705, 0.0
        %v775 = vmax.f32 %v710, 0.0
        %v776 = vmax.f32 %v713, 0.0
        %v777 = vmax.f32 %v718, 0.0
        %v778 = vmax.f32 %v721, 0.0
        %v779 = vmax.f32 %v726, 0.0
        %v780 = vmax.f32 %v729, 0.0
        %v781 = vmax.f32 %v734, 0.0
        %v782 = vmax.f32 %v737, 0.0
        %v783 = vmax.f32 %v742, 0.0
        %v784 = vmax.f32 %v745, 0.0
        %v785 = vmax.f32 %v750, 0.0
        %v786 = vmax.f32 %v753, 0.0
        %v787 = vmax.f32 %v758, 0.0
        %v788 = vpack.c.bf16 %v764, %v763
        %v789 = vpack.c.bf16 %v766, %v765
        %v790 = vpack.c.bf16 %v768, %v767
        %v791 = vpack.c.bf16 %v770, %v769
        %v792 = vpack.c.bf16 %v772, %v771
        %v793 = vpack.c.bf16 %v774, %v773
        %v794 = vpack.c.bf16 %v776, %v775
        %v795 = vpack.c.bf16 %v778, %v777
        %v796 = vpack.c.bf16 %v780, %v779
        %v797 = vpack.c.bf16 %v782, %v781
        %v798 = vpack.c.bf16 %v784, %v783
        %v799 = vpack.c.bf16 %v786, %v785
        %v800 = vpack.c.bf16 %v787, %v787
        %v801 = vld [vmem:[%s3] sm:$0xff]
        %v802 = vld [vmem:[%s3 + $0x8] sm:$0xff]
        %v803 = vld [vmem:[%s3 + $0x10] sm:$0xff]
        %v804 = vld [vmem:[%s3 + $0x18] sm:$0xff]
        %v805 = vld [vmem:[%s3 + $0x20] sm:$0xff]
        %v806 = vld [vmem:[%s3 + $0x28] sm:$0xff]
        %v807 = vld [vmem:[%s3 + $0x30] sm:$0xff]
        %v808 = vld [vmem:[%s3 + $0x38] sm:$0xff]
        %v809 = vld [vmem:[%s3 + $0x40] sm:$0xff]
        %v810 = vld [vmem:[%s3 + $0x48] sm:$0xff]
        %v811 = vld [vmem:[%s3 + $0x50] sm:$0xff]
        %v812 = vld [vmem:[%s3 + $0x58] sm:$0xff]
        %v813 = vld [vmem:[%s3 + $0x60] sm:$0x33]
        %v814 = vld [vmem:[%s4] sm:$0xff]
        %v815 = vld [vmem:[%s4 + $0x8] sm:$0xff]
        %v816 = vld [vmem:[%s4 + $0x10] sm:$0xff]
        %v817 = vld [vmem:[%s4 + $0x18] sm:$0xff]
        %v818 = vld [vmem:[%s4 + $0x20] sm:$0xff]
        %v819 = vld [vmem:[%s4 + $0x28] sm:$0xff]
        %v820 = vld [vmem:[%s4 + $0x30] sm:$0xff]
        %v821 = vld [vmem:[%s4 + $0x38] sm:$0xff]
        %v822 = vld [vmem:[%s4 + $0x40] sm:$0xff]
        %v823 = vld [vmem:[%s4 + $0x48] sm:$0xff]
        %v824 = vld [vmem:[%s4 + $0x50] sm:$0xff]
        %v825 = vld [vmem:[%s4 + $0x58] sm:$0xff]
        %v826 = vld [vmem:[%s4 + $0x60] sm:$0xf]
        %828 = vset.pattern.permute.xlu0 0
        %829 = vperm.xlu0 %828, %v814
        %v830 = vpop.permute.xlu0 %829
        %833 = vset.pattern.permute.xlu0 0
        %834 = vperm.xlu0 %833, %v815
        %v835 = vpop.permute.xlu0 %834
        %838 = vset.pattern.permute.xlu0 0
        %839 = vperm.xlu0 %838, %v816
        %v840 = vpop.permute.xlu0 %839
        %843 = vset.pattern.permute.xlu0 0
        %844 = vperm.xlu0 %843, %v817
        %v845 = vpop.permute.xlu0 %844
        %848 = vset.pattern.permute.xlu0 0
        %849 = vperm.xlu0 %848, %v818
        %v850 = vpop.permute.xlu0 %849
        %853 = vset.pattern.permute.xlu0 0
        %854 = vperm.xlu0 %853, %v819
        %v855 = vpop.permute.xlu0 %854
        %858 = vset.pattern.permute.xlu0 0
        %859 = vperm.xlu0 %858, %v820
        %v860 = vpop.permute.xlu0 %859
        %863 = vset.pattern.permute.xlu0 0
        %864 = vperm.xlu0 %863, %v821
        %v865 = vpop.permute.xlu0 %864
        %868 = vset.pattern.permute.xlu0 0
        %869 = vperm.xlu0 %868, %v822
        %v870 = vpop.permute.xlu0 %869
        %873 = vset.pattern.permute.xlu0 0
        %874 = vperm.xlu0 %873, %v823
        %v875 = vpop.permute.xlu0 %874
        %878 = vset.pattern.permute.xlu0 0
        %879 = vperm.xlu0 %878, %v824
        %v880 = vpop.permute.xlu0 %879
        %883 = vset.pattern.permute.xlu0 0
        %884 = vperm.xlu0 %883, %v825
        %v885 = vpop.permute.xlu0 %884
        %888 = vset.pattern.permute.xlu0 0
        %889 = vperm.xlu0 %888, %v826
        %v890 = vpop.permute.xlu0 %889
        %v905 = vunpack.c.l.b16 %v801
        %v906 = vunpack.c.h.b16 %v801
        %v907 = vunpack.c.l.b16 %v802
        %v908 = vunpack.c.h.b16 %v802
        %v909 = vunpack.c.l.b16 %v803
        %v910 = vunpack.c.h.b16 %v803
        %v911 = vunpack.c.l.b16 %v804
        %v912 = vunpack.c.h.b16 %v804
        %v913 = vunpack.c.l.b16 %v805
        %v914 = vunpack.c.h.b16 %v805
        %v915 = vunpack.c.l.b16 %v806
        %v916 = vunpack.c.h.b16 %v806
        %v917 = vunpack.c.l.b16 %v807
        %v918 = vunpack.c.h.b16 %v807
        %v919 = vunpack.c.l.b16 %v808
        %v920 = vunpack.c.h.b16 %v808
        %v921 = vunpack.c.l.b16 %v809
        %v922 = vunpack.c.h.b16 %v809
        %v923 = vunpack.c.l.b16 %v810
        %v924 = vunpack.c.h.b16 %v810
        %v925 = vunpack.c.l.b16 %v811
        %v926 = vunpack.c.h.b16 %v811
        %v927 = vunpack.c.l.b16 %v812
        %v928 = vunpack.c.h.b16 %v812
        %v929 = vunpack.c.l.b16 %v813
        %v930 = vunpack.c.h.b16 %v813
        %v931 = vpack.c.b16 %v907, %v905
        %v932 = vpack.c.b16 %v908, %v906
        %v933 = vpack.c.b16 %v911, %v909
        %v934 = vpack.c.b16 %v912, %v910
        %v935 = vpack.c.b16 %v915, %v913
        %v936 = vpack.c.b16 %v916, %v914
        %v937 = vpack.c.b16 %v919, %v917
        %v938 = vpack.c.b16 %v920, %v918
        %v939 = vpack.c.b16 %v923, %v921
        %v940 = vpack.c.b16 %v924, %v922
        %v941 = vpack.c.b16 %v927, %v925
        %v942 = vpack.c.b16 %v928, %v926
        %v943 = vpack.c.b16 %v929, %v929
        %v944 = vpack.c.b16 %v930, %v930
        %vm952 = vcmask 588800
        %v954 = vsel %vm952, %v932, 0
        %v957 = vsel %vm952, %v934, 0
        %v960 = vsel %vm952, %v936, 0
        %v963 = vsel %vm952, %v938, 0
        %v966 = vsel %vm952, %v940, 0
        %v969 = vsel %vm952, %v942, 0
        %v972 = vsel %vm952, %v944, 0
        %vm974 = vcmask 1043456
        %v976 = vsel %vm974, %v800, 0
        %978 = vmatprep.subr.bf16.mxu0 0
        %979 = vmatpush1.bf16.msra.mxu0 %v788
        %980 = vmatprep.subr.bf16.mxu0 0
        %981 = vmatpush1.bf16.msra.mxu0 %v789
        %982 = vmatprep.subr.bf16.mxu0 0
        %983 = vmatpush1.bf16.msra.mxu0 %v790
        %984 = vmatprep.subr.bf16.mxu0 0
        %985 = vmatpush1.bf16.msra.mxu0 %v791
        %986 = vmatprep.subr.bf16.mxu0 0
        %987 = vmatpush1.bf16.msra.mxu0 %v792
        %988 = vmatprep.subr.bf16.mxu0 0
        %989 = vmatpush1.bf16.msra.mxu0 %v793
        %990 = vmatprep.subr.bf16.mxu0 0
        %991 = vmatpush1.bf16.msra.mxu0 %v794
        %992 = vmatprep.subr.bf16.mxu0 0
        %993 = vmatpush1.bf16.msra.mxu0 %v795
        %994 = vmatprep.subr.bf16.mxu0 0
        %995 = vmatpush1.bf16.msra.mxu0 %v796
        %996 = vmatprep.subr.bf16.mxu0 0
        %997 = vmatpush1.bf16.msra.mxu0 %v797
        %998 = vmatprep.subr.bf16.mxu0 0
        %999 = vmatpush1.bf16.msra.mxu0 %v798
        %1000 = vmatprep.subr.bf16.mxu0 0
        %1001 = vmatpush1.bf16.msra.mxu0 %v799
        %1002 = vmatprep.subr.bf16.mxu0 0
        %1003 = vmatpush1.bf16.msra.mxu0 %v976
        %1004 = vmatprep.subr.bf16.mxu0 0
        %1005 = vmatpush1.bf16.msra.mxu0 0
        %1006 = vmatprep.subr.bf16.mxu0 0
        %1007 = vmatpush1.bf16.msra.mxu0 0
        %1008 = vmatprep.subr.bf16.mxu0 0
        %1009 = vmatpush1.bf16.msra.mxu0 0
        %1010 = vmatprep.mubr.bf16.mxu0 %v954
        %1011 = vmatmul.mubr.bf16.gmra.mrb[0].mxu0 %v931
        %v1012 = vpop.f32.mrb[0].mxu0
        %v1013 = vadd.f32 %v830, %v1012
        %v1014 = vpop.f32.mrb[0].mxu0
        %v1015 = vpop.f32.mrb[0].mxu0
        %v1016 = vadd.f32 %v835, %v1015
        %v1017 = vpop.f32.mrb[0].mxu0
        %1018 = vmatprep.mubr.bf16.mxu0 %v957
        %1019 = vmatmul.mubr.bf16.gmra.mrb[0].mxu0 %v933
        %v1020 = vpop.f32.mrb[0].mxu0
        %v1021 = vadd.f32 %v840, %v1020
        %v1022 = vpop.f32.mrb[0].mxu0
        %v1023 = vpop.f32.mrb[0].mxu0
        %v1024 = vadd.f32 %v845, %v1023
        %v1025 = vpop.f32.mrb[0].mxu0
        %1026 = vmatprep.mubr.bf16.mxu0 %v960
        %1027 = vmatmul.mubr.bf16.gmra.mrb[0].mxu0 %v935
        %v1028 = vpop.f32.mrb[0].mxu0
        %v1029 = vadd.f32 %v850, %v1028
        %v1030 = vpop.f32.mrb[0].mxu0
        %v1031 = vpop.f32.mrb[0].mxu0
        %v1032 = vadd.f32 %v855, %v1031
        %v1033 = vpop.f32.mrb[0].mxu0
        %1034 = vmatprep.mubr.bf16.mxu0 %v963
        %1035 = vmatmul.mubr.bf16.gmra.mrb[0].mxu0 %v937
        %v1036 = vpop.f32.mrb[0].mxu0
        %v1037 = vadd.f32 %v860, %v1036
        %v1038 = vpop.f32.mrb[0].mxu0
        %v1039 = vpop.f32.mrb[0].mxu0
        %v1040 = vadd.f32 %v865, %v1039
        %v1041 = vpop.f32.mrb[0].mxu0
        %1042 = vmatprep.mubr.bf16.mxu0 %v966
        %1043 = vmatmul.mubr.bf16.gmra.mrb[0].mxu0 %v939
        %v1044 = vpop.f32.mrb[0].mxu0
        %v1045 = vadd.f32 %v870, %v1044
        %v1046 = vpop.f32.mrb[0].mxu0
        %v1047 = vpop.f32.mrb[0].mxu0
        %v1048 = vadd.f32 %v875, %v1047
        %v1049 = vpop.f32.mrb[0].mxu0
        %1050 = vmatprep.mubr.bf16.mxu0 %v969
        %1051 = vmatmul.mubr.bf16.gmra.mrb[0].mxu0 %v941
        %v1052 = vpop.f32.mrb[0].mxu0
        %v1053 = vadd.f32 %v880, %v1052
        %v1054 = vpop.f32.mrb[0].mxu0
        %v1055 = vpop.f32.mrb[0].mxu0
        %v1056 = vadd.f32 %v885, %v1055
        %v1057 = vpop.f32.mrb[0].mxu0
        %1058 = vmatprep.mubr.bf16.mxu0 %v972
        %1059 = vmatmul.mubr.bf16.gmra.mrb[0].mxu0 %v943
        %v1060 = vpop.f32.mrb[0].mxu0
        %v1061 = vadd.f32 %v890, %v1060
        %v1062 = vpop.f32.mrb[0].mxu0
        %v1063 = vpop.f32.mrb[0].mxu0
        %v1064 = vpop.f32.mrb[0].mxu0
        %1065 = vdwg.mxu0
        %v1066 = vmax.f32 %v1013, 0.0
        %v1067 = vmax.f32 %v1016, 0.0
        %v1068 = vmax.f32 %v1021, 0.0
        %v1069 = vmax.f32 %v1024, 0.0
        %v1070 = vmax.f32 %v1029, 0.0
        %v1071 = vmax.f32 %v1032, 0.0
        %v1072 = vmax.f32 %v1037, 0.0
        %v1073 = vmax.f32 %v1040, 0.0
        %v1074 = vmax.f32 %v1045, 0.0
        %v1075 = vmax.f32 %v1048, 0.0
        %v1076 = vmax.f32 %v1053, 0.0
        %v1077 = vmax.f32 %v1056, 0.0
        %v1078 = vmax.f32 %v1061, 0.0
        %v1079 = vld [vmem:[%s5] sm:$0xff]
        %v1080 = vld [vmem:[%s5 + $0x8] sm:$0xff]
        %v1081 = vld [vmem:[%s5 + $0x10] sm:$0xff]
        %v1082 = vld [vmem:[%s5 + $0x18] sm:$0xff]
        %v1083 = vld [vmem:[%s5 + $0x20] sm:$0xff]
        %v1084 = vld [vmem:[%s5 + $0x28] sm:$0xff]
        %v1085 = vld [vmem:[%s5 + $0x30] sm:$0xff]
        %v1086 = vld [vmem:[%s5 + $0x38] sm:$0xff]
        %v1087 = vld [vmem:[%s5 + $0x40] sm:$0xff]
        %v1088 = vld [vmem:[%s5 + $0x48] sm:$0xff]
        %v1089 = vld [vmem:[%s5 + $0x50] sm:$0xff]
        %v1090 = vld [vmem:[%s5 + $0x58] sm:$0xff]
        %v1091 = vld [vmem:[%s5 + $0x60] sm:$0xf]
        %1093 = vset.pattern.permute.xlu0 0
        %1094 = vperm.xlu0 %1093, %v1079
        %v1095 = vpop.permute.xlu0 %1094
        %1098 = vset.pattern.permute.xlu0 0
        %1099 = vperm.xlu0 %1098, %v1080
        %v1100 = vpop.permute.xlu0 %1099
        %1103 = vset.pattern.permute.xlu0 0
        %1104 = vperm.xlu0 %1103, %v1081
        %v1105 = vpop.permute.xlu0 %1104
        %1108 = vset.pattern.permute.xlu0 0
        %1109 = vperm.xlu0 %1108, %v1082
        %v1110 = vpop.permute.xlu0 %1109
        %1113 = vset.pattern.permute.xlu0 0
        %1114 = vperm.xlu0 %1113, %v1083
        %v1115 = vpop.permute.xlu0 %1114
        %1118 = vset.pattern.permute.xlu0 0
        %1119 = vperm.xlu0 %1118, %v1084
        %v1120 = vpop.permute.xlu0 %1119
        %1123 = vset.pattern.permute.xlu0 0
        %1124 = vperm.xlu0 %1123, %v1085
        %v1125 = vpop.permute.xlu0 %1124
        %1128 = vset.pattern.permute.xlu0 0
        %1129 = vperm.xlu0 %1128, %v1086
        %v1130 = vpop.permute.xlu0 %1129
        %1133 = vset.pattern.permute.xlu0 0
        %1134 = vperm.xlu0 %1133, %v1087
        %v1135 = vpop.permute.xlu0 %1134
        %1138 = vset.pattern.permute.xlu0 0
        %1139 = vperm.xlu0 %1138, %v1088
        %v1140 = vpop.permute.xlu0 %1139
        %1143 = vset.pattern.permute.xlu0 0
        %1144 = vperm.xlu0 %1143, %v1089
        %v1145 = vpop.permute.xlu0 %1144
        %1148 = vset.pattern.permute.xlu0 0
        %1149 = vperm.xlu0 %1148, %v1090
        %v1150 = vpop.permute.xlu0 %1149
        %1153 = vset.pattern.permute.xlu0 0
        %1154 = vperm.xlu0 %1153, %v1091
        %v1155 = vpop.permute.xlu0 %1154
        %v1157 = vmul.f32 %v1095, %v1066
        %v1158 = vmul.f32 %v1100, %v1067
        %v1159 = vmul.f32 %v1105, %v1068
        %v1160 = vmul.f32 %v1110, %v1069
        %v1161 = vmul.f32 %v1115, %v1070
        %v1162 = vmul.f32 %v1120, %v1071
        %v1163 = vmul.f32 %v1125, %v1072
        %v1164 = vmul.f32 %v1130, %v1073
        %v1165 = vmul.f32 %v1135, %v1074
        %v1166 = vmul.f32 %v1140, %v1075
        %v1167 = vmul.f32 %v1145, %v1076
        %v1168 = vmul.f32 %v1150, %v1077
        %v1169 = vmul.f32 %v1155, %v1078
        %v1170 = vadd.f32 %v1157, %v1158
        %v1171 = vadd.f32 %v1170, %v1159
        %v1172 = vadd.f32 %v1171, %v1160
        %v1173 = vadd.f32 %v1172, %v1161
        %v1174 = vadd.f32 %v1173, %v1162
        %v1175 = vadd.f32 %v1174, %v1163
        %v1176 = vadd.f32 %v1175, %v1164
        %v1177 = vadd.f32 %v1176, %v1165
        %v1178 = vadd.f32 %v1177, %v1166
        %v1179 = vadd.f32 %v1178, %v1167
        %v1180 = vadd.f32 %v1179, %v1168
        %v1181 = vsel %vm974, %v1169, 0.0
        %v1182 = vadd.f32 %v1180, %v1181
        %v1183 = vrot.slane %v1182, 4
        %v1184 = vadd.f32 %v1182, %v1183
        %v1185 = vrot.slane %v1184, 2
        %v1186 = vadd.f32 %v1184, %v1185
        %v1187 = vrot.slane %v1186, 1
        %v1188 = vadd.f32 %v1186, %v1187
        %v1189 = vld [vmem:[#allocation2] sm:$0x1]
        %1191 = vset.pattern.permute.xlu0 0
        %1192 = vperm.xlu0 %1191, %v1189
        %v1193 = vpop.permute.xlu0 %1192
        %v1195 = vlaneseq
        %v1196 = vshrl.u32 %v1195, 7
        %v1197 = vsub.s32 0, %v1196
        %v1198 = vrot.slane %v1193, %v1197
        %v1199 = vadd.f32 %v1188, %v1198
        %1200 = vst [vmem:[%s285] sm:$0x1] %v1199
        %s1201 = sand.u32 %s183, 1
        %s1202 = scalar_lea.sflag [#allocation4], %s1201
        %s1203 = sand.u32 %s183, 1
        %s1204 = scalar_lea.vmem [#allocation3], %s1203
        // Predicated region
        $region49: #{tpu_custom_call.1} parent=47 // pred_check
          %p1205 = pneg %p193
        $region50: #{tpu_custom_call.1} parent=47 // pred_check_branch
          %1207 = sbr.rel (%p1205) target = $region52
        $region51: #{tpu_custom_call.1} parent=47 // pred_region
          %s1209 = ssub.s32 16, 16
          %1210 = vsyncadd %s1202, %s1209
          %s1211 = smul.addr %s23, 16
          %s1212 = scalar_lea.hbm %s7, %s1211
          %s1214 = sshll.u32 %s1204, 4
          %s1215 = int_to_ptr.vmem [resolvable:$true] %s1214
          %1217 = dma.vmem_to_hbm [thread:$0]  %s1215, 16, %s1212, %s1202
        $region52: #{tpu_custom_call.1} parent=47 // pred_fallthru
          _
      $region48: #{tpu_custom_call.1} parent=5 // pred_fallthru
        _
      %p1218 = scmp.le.s32.totalorder 2, %s18
      // Predicated region
      $region53: #{tpu_custom_call.1} parent=5 // pred_check
        %p1219 = pneg %p1218
      $region54: #{tpu_custom_call.1} parent=5 // pred_check_branch
        %1221 = sbr.rel (%p1219) target = $region56
      $region55: #{tpu_custom_call.1} parent=5 // pred_region
        %s1222 = ssub.s32 %s18, 2
        // Predicated region
        $region57: #{tpu_custom_call.1} parent=55 // pred_check
          %p1223 = pneg %p199
        $region58: #{tpu_custom_call.1} parent=55 // pred_check_branch
          %1225 = sbr.rel (%p1223) target = $region60
        $region59: #{tpu_custom_call.1} parent=55 // pred_region
          %s1226 = sand.u32 %s184, 1
          %s1227 = scalar_lea.sflag [#allocation4], %s1226
          %s1228 = sand.u32 %s184, 1
          %s1229 = scalar_lea.vmem [#allocation3], %s1228
          %1230 = dma.done %s1227, 16
        $region60: #{tpu_custom_call.1} parent=55 // pred_fallthru
          _
      $region56: #{tpu_custom_call.1} parent=5 // pred_fallthru
        _
    $region6: #{tpu_custom_call.1} parent=1 // loop_footer
      %s22 = sadd.s32 1, %s18
    $region7: #{tpu_custom_call.1} parent=1 // loop_footer_branch
      %17 = sbr.rel target = $region3
    $region8: #{tpu_custom_call.1} parent=1 // loop_exit
      _
    %1231 = vsyncpa [#allocation4], 1
    %s1232 = scalar_lea.sflag [#allocation4], 1
    %1233 = vsyncpa %s1232, 1

</llo_original>
